<compile_context>
chip_gen: v5e
topology: v5e:2x2
jax: 0.10.0
libtpu: 0.0.40
codegen_flags: <defaults>
</compile_context>

<pallas_src>
import math

import jax
import jax.numpy as jnp
from jax.experimental import pallas as pl
from jax.experimental.pallas import tpu as pltpu

LANE = 128        # TPU lane width; hidden and output are padded to a multiple of this
NEG_PAD = -1e30   # bias for padded logit columns -> exp() == 0, no softmax contribution


def dqn1_kernel(x_ref, w1_ref, b1_ref, w2_ref, b2_ref, o_ref):
    """One batch tile: softmax( relu(x@W1 + b1) @ W_combo + b_combo )."""
    # Layer 1 + ReLU (bf16 MXU matmul, f32 accumulate / bias / relu).
    x = x_ref[...].astype(jnp.bfloat16)          # cast in-kernel: no extra HBM pass over x
    h = jnp.dot(x, w1_ref[...], preferred_element_type=jnp.float32)
    h = jnp.maximum(h + b1_ref[...], 0.0)

    # Folded (4x hidden Linear + output Linear) affine map, lane-padded to 128 cols.
    logits = jnp.dot(h.astype(jnp.bfloat16), w2_ref[...],
                     preferred_element_type=jnp.float32) + b2_ref[...]

    # Softmax along lanes (nn.Softmax over the feature dim for a 2-D input).
    m = jnp.max(logits, axis=-1, keepdims=True)
    e = jnp.exp(logits - m)
    inv = pl.reciprocal(jnp.sum(e, axis=-1, keepdims=True), approx=True)
    o_ref[...] = (e * inv).astype(o_ref.dtype)   # bf16 store: halves output writeback bytes


def _fold_hidden(wht, bh):
    """Fold h -> ((h@W0+b0)@W1+b1)... into a single (W_eff, b_eff). f32 math, done once."""
    n = wht.shape[0]
    w = wht[0]
    b = bh[0]
    for i in range(1, n):
        w = w @ wht[i]
        b = b @ wht[i] + bh[i]
    return w, b


def _round_up(v, m):
    return ((v + m - 1) // m) * m


def prepare_params(params):
    """One-time param prep (eval mode):
      * fold the 4 hidden Linears + output Linear into one affine map (f32),
      * zero-pad HIDDEN to 128 lanes (W1 cols / b1 / W_combo rows),
      * lane-pad the output columns to 128 (zero weights, -1e30 bias),
      * cast matmul weights to bf16 (biases stay f32)."""
    w1t, b1, wht, bh, w3t, b3 = params
    inp, hidden = w1t.shape
    out = w3t.shape[1]

    # Fold hidden stack, then fold it into the output layer (all f32, prep-time only).
    wf, bf = _fold_hidden(wht, bh)              # (hidden, hidden), (1, hidden)
    w_combo = wf @ w3t                          # (hidden, out)
    b_combo = bf @ w3t + b3                     # (1, out)

    hpad = max(LANE, _round_up(hidden, LANE))
    opad = max(LANE, _round_up(out, LANE))

    w1p = jnp.pad(w1t, ((0, 0), (0, hpad - hidden)))                      # zero cols
    b1p = jnp.pad(b1, ((0, 0), (0, hpad - hidden)))                       # zero bias
    w2p = jnp.pad(w_combo, ((0, hpad - hidden), (0, opad - out)))         # zero rows/cols
    b2p = jnp.pad(b_combo, ((0, 0), (0, opad - out)), constant_values=NEG_PAD)

    return (w1p.astype(jnp.bfloat16), b1p.astype(jnp.float32),
            w2p.astype(jnp.bfloat16), b2p.astype(jnp.float32))


def _auto_tile_b(B):
    """<=2 'parallel' grid steps (v7x megacore) of a multiple-of-16 row tile,
    capped so double-buffered x(f32)+out(bf16) stays far below 64 MiB VMEM."""
    bp = _round_up(B, 16)
    tile = _round_up(pl.cdiv(bp, 2), 16)
    return min(tile, 16384)


def dqn1_forward(x, prepared, *, out_dim, tile_b=None):
    w1, b1, w2, b2 = prepared
    B, inp = x.shape
    hpad = w1.shape[1]
    opad = w2.shape[1]

    if tile_b is None:
        tile_b = _auto_tile_b(B)

    # Pad the batch to a multiple of the batch tile (padded rows sliced off below).
    bp = _round_up(B, tile_b)
    if bp != B:
        x = jnp.pad(x, ((0, bp - B), (0, 0)))
    grid = bp // tile_b

    # Weights: same block every grid step -> stay VMEM-resident (no re-DMA).
    resident = lambda shape: pl.BlockSpec(shape, lambda i: (0, 0))

    cost = pl.CostEstimate(
        flops=int(2 * bp * (inp * hpad + hpad * opad)),
        transcendentals=int(bp * opad + bp),
        bytes_accessed=int(bp * inp * 4 + inp * hpad * 2 + hpad * 4
                           + hpad * opad * 2 + opad * 4 + bp * opad * 2),
    )

    out = pl.pallas_call(
        dqn1_kernel,
        out_shape=jax.ShapeDtypeStruct((bp, opad), jnp.bfloat16),
        grid=(grid,),
        in_specs=[
            pl.BlockSpec((tile_b, inp), lambda i: (i, 0)),   # x: streamed per batch tile
            resident((inp, hpad)),                           # W1 (hidden lane-padded)
            resident((1, hpad)),                             # b1
            resident((hpad, opad)),                           # W_combo (folded, lane-padded)
            resident((1, opad)),                              # b_combo
        ],
        out_specs=pl.BlockSpec((tile_b, opad), lambda i: (i, 0)),
        compiler_params=pltpu.CompilerParams(
            dimension_semantics=("parallel",)),              # v7x: shard batch over both TCs
        cost_estimate=cost,
    )(x.astype(jnp.float32), w1, b1, w2, b2)
    return out[:B, :out_dim].astype(jnp.float32)


def init_params(key, inp, hidden, out, nhidden):
    """Deterministic PyTorch-style init: U(-1/sqrt(fan_in), 1/sqrt(fan_in)).
    Weights stored pre-transposed as [in_features, out_features]."""
    ks = jax.random.split(key, 2 + 2 * nhidden + 2)
    k = 1.0 / math.sqrt(inp)
    w1t = jax.random.uniform(ks[0], (inp, hidden), jnp.float32, -k, k)
    b1 = jax.random.uniform(ks[1], (1, hidden), jnp.float32, -k, k)

    kh = 1.0 / math.sqrt(hidden)
    wh, bh = [], []
    for i in range(nhidden):
        wh.append(jax.random.uniform(ks[2 + 2 * i], (hidden, hidden), jnp.float32, -kh, kh))
        bh.append(jax.random.uniform(ks[3 + 2 * i], (1, hidden), jnp.float32, -kh, kh))
    wht = jnp.stack(wh, axis=0)   # [nhidden, hidden, hidden]
    bhs = jnp.stack(bh, axis=0)   # [nhidden, 1, hidden]

    w3t = jax.random.uniform(ks[-2], (hidden, out), jnp.float32, -kh, kh)
    b3 = jax.random.uniform(ks[-1], (1, out), jnp.float32, -kh, kh)
    return (w1t, b1, wht, bhs, w3t, b3)


def dqn1_reference(x, params):
    """Exact eval-mode math of the PyTorch module (f32, unfolded)."""
    w1t, b1, wht, bh, w3t, b3 = params
    h = jnp.maximum(x @ w1t + b1, 0.0)
    for i in range(wht.shape[0]):
        h = h @ wht[i] + bh[i]      # Dropout(0.2) is identity in eval mode
    return jax.nn.softmax(h @ w3t + b3, axis=-1)


def dqn1_reference_prepared(x, prepared, out_dim):
    """Plain-JAX version of the folded/padded math the kernel computes (bf16 matmuls)."""
    w1, b1, w2, b2 = prepared
    h = jnp.dot(x.astype(jnp.bfloat16), w1, preferred_element_type=jnp.float32)
    h = jnp.maximum(h + b1, 0.0)
    logits = jnp.dot(h.astype(jnp.bfloat16), w2, preferred_element_type=jnp.float32) + b2
    return jax.nn.softmax(logits, axis=-1)[:, :out_dim]


if __name__ == "__main__":
    INP, HIDDEN, OUT, NHIDDEN = 16, 32, 8, 4
    B = 256   # auto tile_b -> 2 parallel grid steps of 128 rows

    key = jax.random.PRNGKey(0)
    kx, kp = jax.random.split(key)
    x = jax.random.normal(kx, (B, INP), dtype=jnp.float32)
    params = init_params(kp, INP, HIDDEN, OUT, NHIDDEN)
    prepared = prepare_params(params)

    out = dqn1_forward(x, prepared, out_dim=OUT)
    out = jax.block_until_ready(out)
    assert out.shape == (B, OUT)

    ref_same = dqn1_reference_prepared(x, prepared, OUT)   # same folded math as the kernel
    ref_f32 = dqn1_reference(x, params)                    # original f32 module math
    assert jnp.allclose(out, ref_same, atol=1e-2), "mismatch vs kernel-math reference"
    assert jnp.allclose(out, ref_f32, atol=4e-2), "mismatch vs f32 module reference"
    assert jnp.allclose(jnp.sum(out, axis=-1), 1.0, atol=2e-2), "softmax rows must sum to ~1"

    # Ragged batch exercises the wrapper's batch-padding path (single small tile).
    out2 = jax.block_until_ready(dqn1_forward(x[:5], prepared, out_dim=OUT))
    assert out2.shape == (5, OUT)
    assert jnp.allclose(out2, out[:5], atol=1e-5), "padded-batch path mismatch"

    print("KERNEL_OK")
</pallas_src>

<mosaic_0001>
module attributes {stable_mosaic.version = 11 : i64} {
  func.func @dqn1_kernel(%arg0: i32, %arg1: memref<128x16xf32, #tpu.memory_space<vmem>>, %arg2: memref<16x128xbf16, #tpu.memory_space<vmem>>, %arg3: memref<1x128xf32, #tpu.memory_space<vmem>>, %arg4: memref<128x128xbf16, #tpu.memory_space<vmem>>, %arg5: memref<1x128xf32, #tpu.memory_space<vmem>>, %arg6: memref<128x128xbf16, #tpu.memory_space<vmem>>) attributes {dimension_semantics = [#tpu.dimension_semantics<parallel>], iteration_bounds = array<i64: 2>, scalar_prefetch = 0 : i64, scratch_operands = 0 : i64, tpu.core_type = #tpu.core_type<tc>, window_params = [{transform_indices = @transform_0, window_bounds = array<i64: 128, 16>}, {pipeline_mode = #tpu.pipeline_mode<synchronous>, transform_indices = @transform_1, window_bounds = array<i64: 16, 128>}, {pipeline_mode = #tpu.pipeline_mode<synchronous>, transform_indices = @transform_2, window_bounds = array<i64: 1, 128>}, {pipeline_mode = #tpu.pipeline_mode<synchronous>, transform_indices = @transform_3, window_bounds = array<i64: 128, 128>}, {pipeline_mode = #tpu.pipeline_mode<synchronous>, transform_indices = @transform_4, window_bounds = array<i64: 1, 128>}, {transform_indices = @transform_5, window_bounds = array<i64: 128, 128>}]} {
    %c0 = arith.constant 0 : index
    %c0_0 = arith.constant 0 : index
    %0 = vector.load %arg1[%c0, %c0_0] : memref<128x16xf32, #tpu.memory_space<vmem>>, vector<128x16xf32>
    %1 = arith.truncf %0 : vector<128x16xf32> to vector<128x16xbf16>
    %c0_1 = arith.constant 0 : index
    %c0_2 = arith.constant 0 : index
    %2 = vector.load %arg2[%c0_1, %c0_2] : memref<16x128xbf16, #tpu.memory_space<vmem>>, vector<16x128xbf16>
    %cst = arith.constant dense<0.000000e+00> : vector<128x128xf32>
    %3 = tpu.matmul %1, %2, %cst {dimension_numbers = #tpu.dot_dimension_numbers<[1], [0], [0], [1], [0, 0, 1, 1], [], []>} : vector<128x16xbf16>, vector<16x128xbf16>, vector<128x128xf32> -> vector<128x128xf32>
    %c0_3 = arith.constant 0 : index
    %c0_4 = arith.constant 0 : index
    %4 = vector.load %arg3[%c0_3, %c0_4] : memref<1x128xf32, #tpu.memory_space<vmem>>, vector<1x128xf32>
    %5 = vector.broadcast %4 : vector<1x128xf32> to vector<128x128xf32>
    %6 = arith.addf %3, %5 : vector<128x128xf32>
    %cst_5 = arith.constant 0.000000e+00 : f32
    %7 = vector.broadcast %cst_5 : f32 to vector<128x128xf32>
    %8 = arith.maximumf %6, %7 : vector<128x128xf32>
    %9 = arith.truncf %8 : vector<128x128xf32> to vector<128x128xbf16>
    %c0_6 = arith.constant 0 : index
    %c0_7 = arith.constant 0 : index
    %10 = vector.load %arg4[%c0_6, %c0_7] : memref<128x128xbf16, #tpu.memory_space<vmem>>, vector<128x128xbf16>
    %cst_8 = arith.constant dense<0.000000e+00> : vector<128x128xf32>
    %11 = tpu.matmul %9, %10, %cst_8 {dimension_numbers = #tpu.dot_dimension_numbers<[1], [0], [0], [1], [0, 0, 1, 1], [], []>} : vector<128x128xbf16>, vector<128x128xbf16>, vector<128x128xf32> -> vector<128x128xf32>
    %c0_9 = arith.constant 0 : index
    %c0_10 = arith.constant 0 : index
    %12 = vector.load %arg5[%c0_9, %c0_10] : memref<1x128xf32, #tpu.memory_space<vmem>>, vector<1x128xf32>
    %13 = vector.broadcast %12 : vector<1x128xf32> to vector<128x128xf32>
    %14 = arith.addf %11, %13 : vector<128x128xf32>
    %cst_11 = arith.constant dense<0xFF800000> : vector<128xf32>
    %15 = vector.multi_reduction <maximumf>, %14, %cst_11 [1] : vector<128x128xf32> to vector<128xf32>
    %16 = vector.shape_cast %15 : vector<128xf32> to vector<128x1xf32>
    %17 = vector.broadcast %16 : vector<128x1xf32> to vector<128x128xf32>
    %18 = arith.subf %14, %17 : vector<128x128xf32>
    %19 = math.exp %18 : vector<128x128xf32>
    %cst_12 = arith.constant dense<0.000000e+00> : vector<128xf32>
    %20 = vector.multi_reduction <add>, %19, %cst_12 [1] : vector<128x128xf32> to vector<128xf32>
    %21 = vector.shape_cast %20 : vector<128xf32> to vector<128x1xf32>
    %22 = tpu.reciprocal %21 {approx = true} : vector<128x1xf32> -> vector<128x1xf32>
    %23 = vector.broadcast %22 : vector<128x1xf32> to vector<128x128xf32>
    %24 = arith.mulf %19, %23 : vector<128x128xf32>
    %25 = arith.truncf %24 : vector<128x128xf32> to vector<128x128xbf16>
    %c0_13 = arith.constant 0 : index
    %c0_14 = arith.constant 0 : index
    %26 = vector.load %arg6[%c0_13, %c0_14] : memref<128x128xbf16, #tpu.memory_space<vmem>>, vector<128x128xbf16>
    tpu.vector_store %arg6[%c0_13, %c0_14], %25 {strides = array<i32>} : memref<128x128xbf16, #tpu.memory_space<vmem>>, vector<128x128xbf16>,
    return
  }
  func.func @transform_0(%arg0: i32) -> (i32, i32) {
    %c0_i32 = arith.constant 0 : i32
    %c0_i32_0 = arith.constant 0 : i32
    return %arg0, %c0_i32 : i32, i32
  }
  func.func @transform_1(%arg0: i32) -> (i32, i32) {
    %c0_i32 = arith.constant 0 : i32
    %c0_i32_0 = arith.constant 0 : i32
    %c0_i32_1 = arith.constant 0 : i32
    return %c0_i32, %c0_i32_0 : i32, i32
  }
  func.func @transform_2(%arg0: i32) -> (i32, i32) {
    %c0_i32 = arith.constant 0 : i32
    %c0_i32_0 = arith.constant 0 : i32
    %c0_i32_1 = arith.constant 0 : i32
    return %c0_i32, %c0_i32_0 : i32, i32
  }
  func.func @transform_3(%arg0: i32) -> (i32, i32) {
    %c0_i32 = arith.constant 0 : i32
    %c0_i32_0 = arith.constant 0 : i32
    %c0_i32_1 = arith.constant 0 : i32
    return %c0_i32, %c0_i32_0 : i32, i32
  }
  func.func @transform_4(%arg0: i32) -> (i32, i32) {
    %c0_i32 = arith.constant 0 : i32
    %c0_i32_0 = arith.constant 0 : i32
    %c0_i32_1 = arith.constant 0 : i32
    return %c0_i32, %c0_i32_0 : i32, i32
  }
  func.func @transform_5(%arg0: i32) -> (i32, i32) {
    %c0_i32 = arith.constant 0 : i32
    %c0_i32_0 = arith.constant 0 : i32
    return %arg0, %c0_i32 : i32, i32
  }
}

</mosaic_0001>

<llo_original>
// kernel: tpu_custom_call.1
$region0: #{tpu_custom_call.1}
  #allocation0 [shape = 'u32[]', space=smem, size = 0x4, offset = 0x4, fixed_abs, tag = 'smem constant byte address 0x4 - core index']
  #allocation1 [shape = 'u32[72,128]{1,0:T(1,128)}', space=vmem, size = 0x9000, scoped, tag = 'internal scratch']
  %s0 = inlined_call_operand.vmem [shape: f32[256,16], index: 0, kind: input, shape index: {}]
  %s1 = inlined_call_operand.vmem [shape: bf16[16,128], index: 1, kind: input, shape index: {}]
  %s2 = inlined_call_operand.vmem [shape: f32[1,128], index: 2, kind: input, shape index: {}]
  %s3 = inlined_call_operand.vmem [shape: bf16[128,128], index: 3, kind: input, shape index: {}]
  %s4 = inlined_call_operand.vmem [shape: f32[1,128], index: 4, kind: input, shape index: {}]
  %s5 = inlined_call_operand.hbm [shape: bf16[256,128], index: 5, kind: output, shape index: {}]
  %s6 = sld [smem:[#allocation0]]
  $region53: #{tpu_custom_call.1} parent=0
    _
  %s8 = ssub.s32 1, %s6
  %s9 = scalar_select 0, %s8, %s6
  $region1: #{tpu_custom_call.1} parent=0
    #allocation2 [shape = 'u8[65536]{0}', space=vmem, size = 0x10000, scoped, tag = 'output window, operand 0']
    #allocation3 [shape = 's32[2]{0}', space=sflag, size = 0x8, scoped, tag = 'scoped memory for tpu_custom_call.1']
    %10 = vsyncpa [#allocation3], 0
    %s11 = scalar_lea.sflag [#allocation3], 1
    %12 = vsyncpa %s11, 0
    loop: start=0, step=1, limit=4
    $region2: #{tpu_custom_call.1} parent=1 // loop_pre_header
      _
    $region3: #{tpu_custom_call.1} parent=1 // loop_header
      %s14 = sphi 0, %s18
      %p15 = scmp.ge.s32.totalorder %s14, 4
      %s24 = sphi 0, %s26
      %s27 = sphi 0, %s24
      %s28 = sphi 0, %s27
      %s44 = sphi 0, %s28
      %s48 = sphi 0, %s48
      %s50 = sphi 0, %s48
      %s51 = sphi 0, %s50
      %s65 = sphi 0, %s51
      %s69 = sphi 0, %s69
      %s71 = sphi 0, %s69
      %s72 = sphi 0, %s71
      %s86 = sphi 0, %s72
      %s90 = sphi 0, %s90
      %s92 = sphi 0, %s90
      %s93 = sphi 0, %s92
      %s107 = sphi 0, %s93
      %s111 = sphi 0, %s111
      %s113 = sphi 0, %s111
      %s114 = sphi 0, %s113
      %s128 = sphi 0, %s114
      %s134 = sphi 0, %s136
      %s137 = sphi 0, %s134
      %s138 = sphi 0, %s137
      %s154 = sphi 0, %s138
    $region4: #{tpu_custom_call.1} parent=1 // loop_header_branch
      %17 = sbr.rel (%p15) target = $region8
    $region5: #{tpu_custom_call.1} parent=1 // loop_body
      %s19 = ssub.s32 %s14, 1
      %s20 = ssub.s32 %s14, 2
      %s21 = sadd.s32 %s14, 1
      %s22 = ssub.s32 %s14, %s21
      %p23 = scmp.eq.s32.totalorder %s22, 0
      %s25 = sadd.s32 %s24, 1
      %s26 = scalar_select %p23, %s24, %s25
      %p29 = pneg %p23
      %p30 = scmp.eq.s32.totalorder %s14, 1
      %p31 = por %p29, %p30
      %p32 = scmp.ne.s32.totalorder %s24, %s27
      %p33 = scmp.eq.s32.totalorder %s14, 0
      %p34 = por %p32, %p33
      %p35 = scmp.ne.s32.totalorder %s24, %s27
      %p36 = scmp.eq.s32.totalorder %s19, 1
      %p37 = por %p35, %p36
      %p38 = scmp.ne.s32.totalorder %s27, %s28
      %p39 = scmp.eq.s32.totalorder %s19, 0
      %p40 = por %p38, %p39
      %p41 = scmp.ne.s32.totalorder %s27, %s28
      %p42 = scmp.eq.s32.totalorder %s20, 1
      %p43 = por %p41, %p42
      %p45 = scmp.ne.s32.totalorder %s28, %s44
      %p46 = scmp.eq.s32.totalorder %s20, 0
      %p47 = por %p45, %p46
      %s49 = sadd.s32 %s48, 1
      %p52 = scmp.eq.s32.totalorder %s14, 1
      %p53 = scmp.ne.s32.totalorder %s48, %s50
      %p54 = scmp.eq.s32.totalorder %s14, 0
      %p55 = por %p53, %p54
      %p56 = scmp.ne.s32.totalorder %s48, %s50
      %p57 = scmp.eq.s32.totalorder %s19, 1
      %p58 = por %p56, %p57
      %p59 = scmp.ne.s32.totalorder %s50, %s51
      %p60 = scmp.eq.s32.totalorder %s19, 0
      %p61 = por %p59, %p60
      %p62 = scmp.ne.s32.totalorder %s50, %s51
      %p63 = scmp.eq.s32.totalorder %s20, 1
      %p64 = por %p62, %p63
      %p66 = scmp.ne.s32.totalorder %s51, %s65
      %p67 = scmp.eq.s32.totalorder %s20, 0
      %p68 = por %p66, %p67
      %s70 = sadd.s32 %s69, 1
      %p73 = scmp.eq.s32.totalorder %s14, 1
      %p74 = scmp.ne.s32.totalorder %s69, %s71
      %p75 = scmp.eq.s32.totalorder %s14, 0
      %p76 = por %p74, %p75
      %p77 = scmp.ne.s32.totalorder %s69, %s71
      %p78 = scmp.eq.s32.totalorder %s19, 1
      %p79 = por %p77, %p78
      %p80 = scmp.ne.s32.totalorder %s71, %s72
      %p81 = scmp.eq.s32.totalorder %s19, 0
      %p82 = por %p80, %p81
      %p83 = scmp.ne.s32.totalorder %s71, %s72
      %p84 = scmp.eq.s32.totalorder %s20, 1
      %p85 = por %p83, %p84
      %p87 = scmp.ne.s32.totalorder %s72, %s86
      %p88 = scmp.eq.s32.totalorder %s20, 0
      %p89 = por %p87, %p88
      %s91 = sadd.s32 %s90, 1
      %p94 = scmp.eq.s32.totalorder %s14, 1
      %p95 = scmp.ne.s32.totalorder %s90, %s92
      %p96 = scmp.eq.s32.totalorder %s14, 0
      %p97 = por %p95, %p96
      %p98 = scmp.ne.s32.totalorder %s90, %s92
      %p99 = scmp.eq.s32.totalorder %s19, 1
      %p100 = por %p98, %p99
      %p101 = scmp.ne.s32.totalorder %s92, %s93
      %p102 = scmp.eq.s32.totalorder %s19, 0
      %p103 = por %p101, %p102
      %p104 = scmp.ne.s32.totalorder %s92, %s93
      %p105 = scmp.eq.s32.totalorder %s20, 1
      %p106 = por %p104, %p105
      %p108 = scmp.ne.s32.totalorder %s93, %s107
      %p109 = scmp.eq.s32.totalorder %s20, 0
      %p110 = por %p108, %p109
      %s112 = sadd.s32 %s111, 1
      %p115 = scmp.eq.s32.totalorder %s14, 1
      %p116 = scmp.ne.s32.totalorder %s111, %s113
      %p117 = scmp.eq.s32.totalorder %s14, 0
      %p118 = por %p116, %p117
      %p119 = scmp.ne.s32.totalorder %s111, %s113
      %p120 = scmp.eq.s32.totalorder %s19, 1
      %p121 = por %p119, %p120
      %p122 = scmp.ne.s32.totalorder %s113, %s114
      %p123 = scmp.eq.s32.totalorder %s19, 0
      %p124 = por %p122, %p123
      %p125 = scmp.ne.s32.totalorder %s113, %s114
      %p126 = scmp.eq.s32.totalorder %s20, 1
      %p127 = por %p125, %p126
      %p129 = scmp.ne.s32.totalorder %s114, %s128
      %p130 = scmp.eq.s32.totalorder %s20, 0
      %p131 = por %p129, %p130
      %s132 = ssub.s32 %s14, %s21
      %p133 = scmp.eq.s32.totalorder %s132, 0
      %s135 = sadd.s32 %s134, 1
      %s136 = scalar_select %p133, %s134, %s135
      %p139 = pneg %p133
      %p140 = scmp.eq.s32.totalorder %s14, 1
      %p141 = por %p139, %p140
      %p142 = scmp.ne.s32.totalorder %s134, %s137
      %p143 = scmp.eq.s32.totalorder %s14, 0
      %p144 = por %p142, %p143
      %p145 = scmp.ne.s32.totalorder %s134, %s137
      %p146 = scmp.eq.s32.totalorder %s19, 1
      %p147 = por %p145, %p146
      %p148 = scmp.ne.s32.totalorder %s137, %s138
      %p149 = scmp.eq.s32.totalorder %s19, 0
      %p150 = por %p148, %p149
      %p151 = scmp.ne.s32.totalorder %s137, %s138
      %p152 = scmp.eq.s32.totalorder %s20, 1
      %p153 = por %p151, %p152
      %p155 = scmp.ne.s32.totalorder %s138, %s154
      %p156 = scmp.eq.s32.totalorder %s20, 0
      %p157 = por %p155, %p156
      %p158 = scmp.le.s32.totalorder 1, %s14
      %p159 = scmp.lt.s32.totalorder %s14, 3
      %p160 = pnand %p158, %p159
      %p161 = pneg %p160
      // Predicated region
      $region9: #{tpu_custom_call.1} parent=5 // pred_check
        _
      $region10: #{tpu_custom_call.1} parent=5 // pred_check_branch
        %163 = sbr.rel (%p160) target = $region12
      $region11: #{tpu_custom_call.1} parent=5 // pred_region
        %s164 = ssub.s32 %s14, 1
        // Predicated region
        $region13: #{tpu_custom_call.1} parent=11 // pred_check
          %p165 = pneg %p61
        $region14: #{tpu_custom_call.1} parent=11 // pred_check_branch
          %167 = sbr.rel (%p165) target = $region16
        $region15: #{tpu_custom_call.1} parent=11 // pred_region
          _
        $region16: #{tpu_custom_call.1} parent=11 // pred_fallthru
          _
        // Predicated region
        $region17: #{tpu_custom_call.1} parent=11 // pred_check
          %p168 = pneg %p82
        $region18: #{tpu_custom_call.1} parent=11 // pred_check_branch
          %170 = sbr.rel (%p168) target = $region20
        $region19: #{tpu_custom_call.1} parent=11 // pred_region
          _
        $region20: #{tpu_custom_call.1} parent=11 // pred_fallthru
          _
        // Predicated region
        $region21: #{tpu_custom_call.1} parent=11 // pred_check
          %p171 = pneg %p103
        $region22: #{tpu_custom_call.1} parent=11 // pred_check_branch
          %173 = sbr.rel (%p171) target = $region24
        $region23: #{tpu_custom_call.1} parent=11 // pred_region
          _
        $region24: #{tpu_custom_call.1} parent=11 // pred_fallthru
          _
        // Predicated region
        $region25: #{tpu_custom_call.1} parent=11 // pred_check
          %p174 = pneg %p124
        $region26: #{tpu_custom_call.1} parent=11 // pred_check_branch
          %176 = sbr.rel (%p174) target = $region28
        $region27: #{tpu_custom_call.1} parent=11 // pred_region
          _
        $region28: #{tpu_custom_call.1} parent=11 // pred_fallthru
          _
      $region12: #{tpu_custom_call.1} parent=5 // pred_fallthru
        _
      %p177 = scmp.lt.s32.totalorder %s14, 2
      // Predicated region
      $region29: #{tpu_custom_call.1} parent=5 // pred_check
        %p178 = pneg %p177
      $region30: #{tpu_custom_call.1} parent=5 // pred_check_branch
        %180 = sbr.rel (%p178) target = $region32
      $region31: #{tpu_custom_call.1} parent=5 // pred_region
        // Predicated region
        $region33: #{tpu_custom_call.1} parent=31 // pred_check
          %p181 = pneg %p34
        $region34: #{tpu_custom_call.1} parent=31 // pred_check_branch
          %183 = sbr.rel (%p181) target = $region36
        $region35: #{tpu_custom_call.1} parent=31 // pred_region
          %s184 = smul.u32 16, %s14
          %p185 = scmp.lt.s32.totalorder %s184, 31
          %s186 = scalar_select %p185, %s184, 31
          %s187 = smul.addr %s186, 8
          %s188 = scalar_lea.vmem %s0, %s187
          %s189 = smul.u32 16, %s14
        $region36: #{tpu_custom_call.1} parent=31 // pred_fallthru
          _
      $region32: #{tpu_custom_call.1} parent=5 // pred_fallthru
        _
      %p190 = scmp.le.s32.totalorder 1, %s14
      %p191 = scmp.lt.s32.totalorder %s14, 3
      %p192 = pnand %p190, %p191
      %p193 = pneg %p192
      // Predicated region
      $region37: #{tpu_custom_call.1} parent=5 // pred_check
        _
      $region38: #{tpu_custom_call.1} parent=5 // pred_check_branch
        %195 = sbr.rel (%p192) target = $region40
      $region39: #{tpu_custom_call.1} parent=5 // pred_region
        %s196 = ssub.s32 %s14, 1
        %s197 = smul.u32 16, %s19
        %p198 = scmp.lt.s32.totalorder %s197, 31
        %s199 = scalar_select %p198, %s197, 31
        %s200 = smul.addr %s199, 8
        %s201 = scalar_lea.vmem %s0, %s200
        %p202 = pneg %p40
        %p203 = pneg %p37
        %p204 = pneg %p61
        %p205 = pneg %p58
        %p206 = pneg %p82
        %p207 = pneg %p79
        %p208 = pneg %p103
        %p209 = pneg %p100
        %p210 = pneg %p124
        %p211 = pneg %p121
        %p212 = pneg %p150
        %p213 = pneg %p147
        %s214 = sand.u32 %s137, 1
        %s215 = scalar_lea.sflag [#allocation3], %s214
        %s216 = sand.u32 %s137, 1
        %s217 = smul.addr %s216, 64
        %s218 = scalar_lea.vmem [#allocation2], %s217
        %s219 = smul.u32 16, %s19
        %p220 = scmp.lt.s32.totalorder %s219, 31
        %s221 = scalar_select %p220, %s219, 31
        %s222 = smul.addr %s221, 8
        %s223 = scalar_lea.vmem %s0, %s222
        %s224 = smul.u32 16, %s19
        %s225 = smul.u32 16, %s19
        %v227 = vld [vmem:[%s223] sm:$0xff]
        %v228 = vld [vmem:[%s223 + $0x8] sm:$0xff]
        %v229 = vld [vmem:[%s223 + $0x10] sm:$0xff]
        %v230 = vld [vmem:[%s223 + $0x18] sm:$0xff]
        %v231 = vld [vmem:[%s223 + $0x20] sm:$0xff]
        %v232 = vld [vmem:[%s223 + $0x28] sm:$0xff]
        %v233 = vld [vmem:[%s223 + $0x30] sm:$0xff]
        %v234 = vld [vmem:[%s223 + $0x38] sm:$0xff]
        %v235 = vld [vmem:[%s223 + $0x40] sm:$0xff]
        %v236 = vld [vmem:[%s223 + $0x48] sm:$0xff]
        %v237 = vld [vmem:[%s223 + $0x50] sm:$0xff]
        %v238 = vld [vmem:[%s223 + $0x58] sm:$0xff]
        %v239 = vld [vmem:[%s223 + $0x60] sm:$0xff]
        %v240 = vld [vmem:[%s223 + $0x68] sm:$0xff]
        %v241 = vld [vmem:[%s223 + $0x70] sm:$0xff]
        %v242 = vld [vmem:[%s223 + $0x78] sm:$0xff]
        %v243 = vpack.c.bf16 %v228, %v227
        %v244 = vpack.c.bf16 %v230, %v229
        %v245 = vpack.c.bf16 %v232, %v231
        %v246 = vpack.c.bf16 %v234, %v233
        %v247 = vpack.c.bf16 %v236, %v235
        %v248 = vpack.c.bf16 %v238, %v237
        %v249 = vpack.c.bf16 %v240, %v239
        %v250 = vpack.c.bf16 %v242, %v241
        %v251 = vld [vmem:[%s1] sm:$0xf]
        %v252 = vld [vmem:[%s1 + $0x4] sm:$0xf]
        %v253 = vld [vmem:[%s2] sm:$0x1]
        %v255 = vperm.slane %v253, 0
        %v259 = vunpack.c.l.b16 %v251
        %v260 = vunpack.c.l.b16 %v252
        %v261 = vpack.c.b16 %v260, %v259
        %vm263 = vcmask 130048
        %v265 = vsel %vm263, %v243, 0
        %v268 = vsel %vm263, %v244, 0
        %v271 = vsel %vm263, %v245, 0
        %v274 = vsel %vm263, %v246, 0
        %v277 = vsel %vm263, %v247, 0
        %v280 = vsel %vm263, %v248, 0
        %v283 = vsel %vm263, %v249, 0
        %v286 = vsel %vm263, %v250, 0
        %288 = vmatpush.bf16.msra.mxu0 0
        %289 = vmatpush.bf16.msra.mxu0 0
        %290 = vmatpush.bf16.msra.mxu0 0
        %291 = vmatpush.bf16.msra.mxu0 0
        %292 = vmatpush.bf16.msra.mxu0 0
        %293 = vmatpush.bf16.msra.mxu0 0
        %294 = vmatpush.bf16.msra.mxu0 0
        %295 = vmatpush.bf16.msra.mxu0 %v261
        %296 = vmatmul.bf16.gmra.mxu0 %v265
        %v297 = vpop.f32.mrf.mxu0
        %v298 = vadd.f32 %v255, %v297
        %v299 = vpop.f32.mrf.mxu0
        %v300 = vadd.f32 %v255, %v299
        %301 = vmatmul.bf16.gmra.mxu0 %v268
        %v302 = vpop.f32.mrf.mxu0
        %v303 = vadd.f32 %v255, %v302
        %v304 = vpop.f32.mrf.mxu0
        %v305 = vadd.f32 %v255, %v304
        %306 = vmatmul.bf16.gmra.mxu0 %v271
        %v307 = vpop.f32.mrf.mxu0
        %v308 = vadd.f32 %v255, %v307
        %v309 = vpop.f32.mrf.mxu0
        %v310 = vadd.f32 %v255, %v309
        %311 = vmatmul.bf16.gmra.mxu0 %v274
        %v312 = vpop.f32.mrf.mxu0
        %v313 = vadd.f32 %v255, %v312
        %v314 = vpop.f32.mrf.mxu0
        %v315 = vadd.f32 %v255, %v314
        %316 = vmatmul.bf16.gmra.mxu0 %v277
        %v317 = vpop.f32.mrf.mxu0
        %v318 = vadd.f32 %v255, %v317
        %v319 = vpop.f32.mrf.mxu0
        %v320 = vadd.f32 %v255, %v319
        %321 = vmatmul.bf16.gmra.mxu0 %v280
        %v322 = vpop.f32.mrf.mxu0
        %v323 = vadd.f32 %v255, %v322
        %v324 = vpop.f32.mrf.mxu0
        %v325 = vadd.f32 %v255, %v324
        %326 = vmatmul.bf16.gmra.mxu0 %v283
        %v327 = vpop.f32.mrf.mxu0
        %v328 = vadd.f32 %v255, %v327
        %v329 = vpop.f32.mrf.mxu0
        %v330 = vadd.f32 %v255, %v329
        %331 = vmatmul.bf16.gmra.mxu0 %v286
        %v332 = vpop.f32.mrf.mxu0
        %v333 = vadd.f32 %v255, %v332
        %v334 = vpop.f32.mrf.mxu0
        %v335 = vadd.f32 %v255, %v334
        %336 = vdwg.mxu0
        %v337 = vmax.f32 %v298, 0.0
        %v338 = vmax.f32 %v300, 0.0
        %v339 = vmax.f32 %v303, 0.0
        %v340 = vmax.f32 %v305, 0.0
        %v341 = vmax.f32 %v308, 0.0
        %v342 = vmax.f32 %v310, 0.0
        %v343 = vmax.f32 %v313, 0.0
        %v344 = vmax.f32 %v315, 0.0
        %v345 = vmax.f32 %v318, 0.0
        %v346 = vmax.f32 %v320, 0.0
        %v347 = vmax.f32 %v323, 0.0
        %v348 = vmax.f32 %v325, 0.0
        %v349 = vmax.f32 %v328, 0.0
        %v350 = vmax.f32 %v330, 0.0
        %v351 = vmax.f32 %v333, 0.0
        %v352 = vmax.f32 %v335, 0.0
        %v353 = vpack.c.bf16 %v338, %v337
        %v354 = vpack.c.bf16 %v340, %v339
        %v355 = vpack.c.bf16 %v342, %v341
        %v356 = vpack.c.bf16 %v344, %v343
        %v357 = vpack.c.bf16 %v346, %v345
        %v358 = vpack.c.bf16 %v348, %v347
        %v359 = vpack.c.bf16 %v350, %v349
        %v360 = vpack.c.bf16 %v352, %v351
        %v361 = vld [vmem:[%s3] sm:$0xf]
        %v362 = vld [vmem:[%s3 + $0x4] sm:$0xf]
        %v363 = vld [vmem:[%s3 + $0x8] sm:$0xf]
        %v364 = vld [vmem:[%s3 + $0xc] sm:$0xf]
        %v365 = vld [vmem:[%s3 + $0x10] sm:$0xf]
        %v366 = vld [vmem:[%s3 + $0x14] sm:$0xf]
        %v367 = vld [vmem:[%s3 + $0x18] sm:$0xf]
        %v368 = vld [vmem:[%s3 + $0x1c] sm:$0xf]
        %v369 = vld [vmem:[%s3 + $0x20] sm:$0xf]
        %v370 = vld [vmem:[%s3 + $0x24] sm:$0xf]
        %v371 = vld [vmem:[%s3 + $0x28] sm:$0xf]
        %v372 = vld [vmem:[%s3 + $0x2c] sm:$0xf]
        %v373 = vld [vmem:[%s3 + $0x30] sm:$0xf]
        %v374 = vld [vmem:[%s3 + $0x34] sm:$0xf]
        %v375 = vld [vmem:[%s3 + $0x38] sm:$0xf]
        %v376 = vld [vmem:[%s3 + $0x3c] sm:$0xf]
        %v377 = vld [vmem:[%s4] sm:$0x1]
        %v379 = vperm.slane %v377, 0
        %v397 = vunpack.c.l.b16 %v361
        %v398 = vunpack.c.l.b16 %v362
        %v399 = vunpack.c.l.b16 %v363
        %v400 = vunpack.c.l.b16 %v364
        %v401 = vunpack.c.l.b16 %v365
        %v402 = vunpack.c.l.b16 %v366
        %v403 = vunpack.c.l.b16 %v367
        %v404 = vunpack.c.l.b16 %v368
        %v405 = vunpack.c.l.b16 %v369
        %v406 = vunpack.c.l.b16 %v370
        %v407 = vunpack.c.l.b16 %v371
        %v408 = vunpack.c.l.b16 %v372
        %v409 = vunpack.c.l.b16 %v373
        %v410 = vunpack.c.l.b16 %v374
        %v411 = vunpack.c.l.b16 %v375
        %v412 = vunpack.c.l.b16 %v376
        %v413 = vpack.c.b16 %v398, %v397
        %v414 = vpack.c.b16 %v400, %v399
        %v415 = vpack.c.b16 %v402, %v401
        %v416 = vpack.c.b16 %v404, %v403
        %v417 = vpack.c.b16 %v406, %v405
        %v418 = vpack.c.b16 %v408, %v407
        %v419 = vpack.c.b16 %v410, %v409
        %v420 = vpack.c.b16 %v412, %v411
        %429 = vmatpush.bf16.msra.mxu0 %v420
        %430 = vmatpush.bf16.msra.mxu0 %v419
        %431 = vmatpush.bf16.msra.mxu0 %v418
        %432 = vmatpush.bf16.msra.mxu0 %v417
        %433 = vmatpush.bf16.msra.mxu0 %v416
        %434 = vmatpush.bf16.msra.mxu0 %v415
        %435 = vmatpush.bf16.msra.mxu0 %v414
        %436 = vmatpush.bf16.msra.mxu0 %v413
        %437 = vmatmul.bf16.gmra.mxu0 %v353
        %v438 = vpop.f32.mrf.mxu0
        %v439 = vadd.f32 %v379, %v438
        %v440 = vpop.f32.mrf.mxu0
        %v441 = vadd.f32 %v379, %v440
        %442 = vmatmul.bf16.gmra.mxu0 %v354
        %v443 = vpop.f32.mrf.mxu0
        %v444 = vadd.f32 %v379, %v443
        %v445 = vpop.f32.mrf.mxu0
        %v446 = vadd.f32 %v379, %v445
        %447 = vmatmul.bf16.gmra.mxu0 %v355
        %v448 = vpop.f32.mrf.mxu0
        %v449 = vadd.f32 %v379, %v448
        %v450 = vpop.f32.mrf.mxu0
        %v451 = vadd.f32 %v379, %v450
        %452 = vmatmul.bf16.gmra.mxu0 %v356
        %v453 = vpop.f32.mrf.mxu0
        %v454 = vadd.f32 %v379, %v453
        %v455 = vpop.f32.mrf.mxu0
        %v456 = vadd.f32 %v379, %v455
        %457 = vmatmul.bf16.gmra.mxu0 %v357
        %v458 = vpop.f32.mrf.mxu0
        %v459 = vadd.f32 %v379, %v458
        %v460 = vpop.f32.mrf.mxu0
        %v461 = vadd.f32 %v379, %v460
        %462 = vmatmul.bf16.gmra.mxu0 %v358
        %v463 = vpop.f32.mrf.mxu0
        %v464 = vadd.f32 %v379, %v463
        %v465 = vpop.f32.mrf.mxu0
        %v466 = vadd.f32 %v379, %v465
        %467 = vmatmul.bf16.gmra.mxu0 %v359
        %v468 = vpop.f32.mrf.mxu0
        %v469 = vadd.f32 %v379, %v468
        %v470 = vpop.f32.mrf.mxu0
        %v471 = vadd.f32 %v379, %v470
        %472 = vmatmul.bf16.gmra.mxu0 %v360
        %v473 = vpop.f32.mrf.mxu0
        %v474 = vadd.f32 %v379, %v473
        %v475 = vpop.f32.mrf.mxu0
        %v476 = vadd.f32 %v379, %v475
        %477 = vdwg.mxu0
        %478 = vmax.xlane.f32.xlu0 %v439
        %v479 = vpop.xlane.xlu0 %478
        %480 = vmax.xlane.f32.xlu0 %v441
        %v481 = vpop.xlane.xlu0 %480
        %482 = vmax.xlane.f32.xlu0 %v444
        %v483 = vpop.xlane.xlu0 %482
        %484 = vmax.xlane.f32.xlu0 %v446
        %v485 = vpop.xlane.xlu0 %484
        %486 = vmax.xlane.f32.xlu0 %v449
        %v487 = vpop.xlane.xlu0 %486
        %488 = vmax.xlane.f32.xlu0 %v451
        %v489 = vpop.xlane.xlu0 %488
        %490 = vmax.xlane.f32.xlu0 %v454
        %v491 = vpop.xlane.xlu0 %490
        %492 = vmax.xlane.f32.xlu0 %v456
        %v493 = vpop.xlane.xlu0 %492
        %494 = vmax.xlane.f32.xlu0 %v459
        %v495 = vpop.xlane.xlu0 %494
        %496 = vmax.xlane.f32.xlu0 %v461
        %v497 = vpop.xlane.xlu0 %496
        %498 = vmax.xlane.f32.xlu0 %v464
        %v499 = vpop.xlane.xlu0 %498
        %500 = vmax.xlane.f32.xlu0 %v466
        %v501 = vpop.xlane.xlu0 %500
        %502 = vmax.xlane.f32.xlu0 %v469
        %v503 = vpop.xlane.xlu0 %502
        %504 = vmax.xlane.f32.xlu0 %v471
        %v505 = vpop.xlane.xlu0 %504
        %506 = vmax.xlane.f32.xlu0 %v474
        %v507 = vpop.xlane.xlu0 %506
        %508 = vmax.xlane.f32.xlu0 %v476
        %v509 = vpop.xlane.xlu0 %508
        %v510 = vsub.f32 %v439, %v479
        %v511 = vsub.f32 %v441, %v481
        %v512 = vsub.f32 %v444, %v483
        %v513 = vsub.f32 %v446, %v485
        %v514 = vsub.f32 %v449, %v487
        %v515 = vsub.f32 %v451, %v489
        %v516 = vsub.f32 %v454, %v491
        %v517 = vsub.f32 %v456, %v493
        %v518 = vsub.f32 %v459, %v495
        %v519 = vsub.f32 %v461, %v497
        %v520 = vsub.f32 %v464, %v499
        %v521 = vsub.f32 %v466, %v501
        %v522 = vsub.f32 %v469, %v503
        %v523 = vsub.f32 %v471, %v505
        %v524 = vsub.f32 %v474, %v507
        %v525 = vsub.f32 %v476, %v509
        %v526 = vmul.f32 %v510, 1.442695
        %v527 = vpow.pop %v526
        %v528 = vmul.f32 %v511, 1.442695
        %v529 = vpow.pop %v528
        %v530 = vmul.f32 %v512, 1.442695
        %v531 = vpow.pop %v530
        %v532 = vmul.f32 %v513, 1.442695
        %v533 = vpow.pop %v532
        %v534 = vmul.f32 %v514, 1.442695
        %v535 = vpow.pop %v534
        %v536 = vmul.f32 %v515, 1.442695
        %v537 = vpow.pop %v536
        %v538 = vmul.f32 %v516, 1.442695
        %v539 = vpow.pop %v538
        %v540 = vmul.f32 %v517, 1.442695
        %v541 = vpow.pop %v540
        %v542 = vmul.f32 %v518, 1.442695
        %v543 = vpow.pop %v542
        %v544 = vmul.f32 %v519, 1.442695
        %v545 = vpow.pop %v544
        %v546 = vmul.f32 %v520, 1.442695
        %v547 = vpow.pop %v546
        %v548 = vmul.f32 %v521, 1.442695
        %v549 = vpow.pop %v548
        %v550 = vmul.f32 %v522, 1.442695
        %v551 = vpow.pop %v550
        %v552 = vmul.f32 %v523, 1.442695
        %v553 = vpow.pop %v552
        %v554 = vmul.f32 %v524, 1.442695
        %v555 = vpow.pop %v554
        %v556 = vmul.f32 %v525, 1.442695
        %v557 = vpow.pop %v556
        %558 = vadd.xlane.f32.xlu0 %v527
        %v559 = vpop.xlane.xlu0 %558
        %560 = vadd.xlane.f32.xlu0 %v529
        %v561 = vpop.xlane.xlu0 %560
        %562 = vadd.xlane.f32.xlu0 %v531
        %v563 = vpop.xlane.xlu0 %562
        %564 = vadd.xlane.f32.xlu0 %v533
        %v565 = vpop.xlane.xlu0 %564
        %566 = vadd.xlane.f32.xlu0 %v535
        %v567 = vpop.xlane.xlu0 %566
        %568 = vadd.xlane.f32.xlu0 %v537
        %v569 = vpop.xlane.xlu0 %568
        %570 = vadd.xlane.f32.xlu0 %v539
        %v571 = vpop.xlane.xlu0 %570
        %572 = vadd.xlane.f32.xlu0 %v541
        %v573 = vpop.xlane.xlu0 %572
        %574 = vadd.xlane.f32.xlu0 %v543
        %v575 = vpop.xlane.xlu0 %574
        %576 = vadd.xlane.f32.xlu0 %v545
        %v577 = vpop.xlane.xlu0 %576
        %578 = vadd.xlane.f32.xlu0 %v547
        %v579 = vpop.xlane.xlu0 %578
        %580 = vadd.xlane.f32.xlu0 %v549
        %v581 = vpop.xlane.xlu0 %580
        %582 = vadd.xlane.f32.xlu0 %v551
        %v583 = vpop.xlane.xlu0 %582
        %584 = vadd.xlane.f32.xlu0 %v553
        %v585 = vpop.xlane.xlu0 %584
        %586 = vadd.xlane.f32.xlu0 %v555
        %v587 = vpop.xlane.xlu0 %586
        %588 = vadd.xlane.f32.xlu0 %v557
        %v589 = vpop.xlane.xlu0 %588
        %v590 = vrcp.pop %v559
        %v591 = vrcp.pop %v561
        %v592 = vrcp.pop %v563
        %v593 = vrcp.pop %v565
        %v594 = vrcp.pop %v567
        %v595 = vrcp.pop %v569
        %v596 = vrcp.pop %v571
        %v597 = vrcp.pop %v573
        %v598 = vrcp.pop %v575
        %v599 = vrcp.pop %v577
        %v600 = vrcp.pop %v579
        %v601 = vrcp.pop %v581
        %v602 = vrcp.pop %v583
        %v603 = vrcp.pop %v585
        %v604 = vrcp.pop %v587
        %v605 = vrcp.pop %v589
        %v606 = vmul.f32 %v527, %v590
        %v607 = vmul.f32 %v529, %v591
        %v608 = vmul.f32 %v531, %v592
        %v609 = vmul.f32 %v533, %v593
        %v610 = vmul.f32 %v535, %v594
        %v611 = vmul.f32 %v537, %v595
        %v612 = vmul.f32 %v539, %v596
        %v613 = vmul.f32 %v541, %v597
        %v614 = vmul.f32 %v543, %v598
        %v615 = vmul.f32 %v545, %v599
        %v616 = vmul.f32 %v547, %v600
        %v617 = vmul.f32 %v549, %v601
        %v618 = vmul.f32 %v551, %v602
        %v619 = vmul.f32 %v553, %v603
        %v620 = vmul.f32 %v555, %v604
        %v621 = vmul.f32 %v557, %v605
        %v622 = vpack.c.bf16 %v606, %v606
        %v623 = vpack.c.bf16 %v607, %v607
        %v624 = vpack.c.bf16 %v608, %v608
        %v625 = vpack.c.bf16 %v609, %v609
        %v626 = vpack.c.bf16 %v610, %v610
        %v627 = vpack.c.bf16 %v611, %v611
        %v628 = vpack.c.bf16 %v612, %v612
        %v629 = vpack.c.bf16 %v613, %v613
        %v630 = vpack.c.bf16 %v614, %v614
        %v631 = vpack.c.bf16 %v615, %v615
        %v632 = vpack.c.bf16 %v616, %v616
        %v633 = vpack.c.bf16 %v617, %v617
        %v634 = vpack.c.bf16 %v618, %v618
        %v635 = vpack.c.bf16 %v619, %v619
        %v636 = vpack.c.bf16 %v620, %v620
        %v637 = vpack.c.bf16 %v621, %v621
        %638 = vst [vmem:[%s218] sm:$0xf] %v622
        %639 = vst [vmem:[%s218 + $0x4] sm:$0xf] %v623
        %640 = vst [vmem:[%s218 + $0x8] sm:$0xf] %v624
        %641 = vst [vmem:[%s218 + $0xc] sm:$0xf] %v625
        %642 = vst [vmem:[%s218 + $0x10] sm:$0xf] %v626
        %643 = vst [vmem:[%s218 + $0x14] sm:$0xf] %v627
        %644 = vst [vmem:[%s218 + $0x18] sm:$0xf] %v628
        %645 = vst [vmem:[%s218 + $0x1c] sm:$0xf] %v629
        %646 = vst [vmem:[%s218 + $0x20] sm:$0xf] %v630
        %647 = vst [vmem:[%s218 + $0x24] sm:$0xf] %v631
        %648 = vst [vmem:[%s218 + $0x28] sm:$0xf] %v632
        %649 = vst [vmem:[%s218 + $0x2c] sm:$0xf] %v633
        %650 = vst [vmem:[%s218 + $0x30] sm:$0xf] %v634
        %651 = vst [vmem:[%s218 + $0x34] sm:$0xf] %v635
        %652 = vst [vmem:[%s218 + $0x38] sm:$0xf] %v636
        %653 = vst [vmem:[%s218 + $0x3c] sm:$0xf] %v637
        %s654 = sand.u32 %s137, 1
        %s655 = scalar_lea.sflag [#allocation3], %s654
        %s656 = sand.u32 %s137, 1
        %s657 = smul.addr %s656, 64
        %s658 = scalar_lea.vmem [#allocation2], %s657
        // Predicated region
        $region41: #{tpu_custom_call.1} parent=39 // pred_check
          %p659 = pneg %p147
        $region42: #{tpu_custom_call.1} parent=39 // pred_check_branch
          %661 = sbr.rel (%p659) target = $region44
        $region43: #{tpu_custom_call.1} parent=39 // pred_region
          %s662 = smul.u32 16, %s19
          %664 = vsyncadd %s655, 0
          %s665 = smul.addr %s662, 4
          %s666 = scalar_lea.hbm %s5, %s665
          %s667 = sshll.u32 %s658, 4
          %s668 = int_to_ptr.vmem [resolvable:$true] %s667
          %s669 = sshll.u32 %s666, 4
          %s670 = int_to_ptr.hbm [resolvable:$true] %s669
          %675 = dma.vmem_to_hbm [thread:$0]  %s668, 1024, %s670, %s655, 64, 64, 4
        $region44: #{tpu_custom_call.1} parent=39 // pred_fallthru
          _
      $region40: #{tpu_custom_call.1} parent=5 // pred_fallthru
        _
      %p676 = scmp.le.s32.totalorder 2, %s14
      // Predicated region
      $region45: #{tpu_custom_call.1} parent=5 // pred_check
        %p677 = pneg %p676
      $region46: #{tpu_custom_call.1} parent=5 // pred_check_branch
        %679 = sbr.rel (%p677) target = $region48
      $region47: #{tpu_custom_call.1} parent=5 // pred_region
        %s680 = ssub.s32 %s14, 2
        // Predicated region
        $region49: #{tpu_custom_call.1} parent=47 // pred_check
          %p681 = pneg %p153
        $region50: #{tpu_custom_call.1} parent=47 // pred_check_branch
          %683 = sbr.rel (%p681) target = $region52
        $region51: #{tpu_custom_call.1} parent=47 // pred_region
          %s684 = sand.u32 %s138, 1
          %s685 = scalar_lea.sflag [#allocation3], %s684
          %s686 = sand.u32 %s138, 1
          %s687 = smul.addr %s686, 64
          %s688 = scalar_lea.vmem [#allocation2], %s687
          %690 = dma.done %s685, 1024
        $region52: #{tpu_custom_call.1} parent=47 // pred_fallthru
          _
      $region48: #{tpu_custom_call.1} parent=5 // pred_fallthru
        _
    $region6: #{tpu_custom_call.1} parent=1 // loop_footer
      %s18 = sadd.s32 1, %s14
    $region7: #{tpu_custom_call.1} parent=1 // loop_footer_branch
      %13 = sbr.rel target = $region3
    $region8: #{tpu_custom_call.1} parent=1 // loop_exit
      _
    %691 = vsyncpa [#allocation3], 1
    %s692 = scalar_lea.sflag [#allocation3], 1
    %693 = vsyncpa %s692, 1

</llo_original>
